<compile_context>
chip_gen: v7x
topology: tpu7x:2x2x1
jax: 0.10.0
libtpu: 0.0.40
codegen_flags: <defaults>
</compile_context>

<pallas_src>
import functools

import jax
import jax.numpy as jnp
from jax.experimental import pallas as pl
from jax.experimental.pallas import tpu as pltpu


# ---------------------------------------------------------------------------
# Per-generation VMEM budgeting
# ---------------------------------------------------------------------------

def _vmem_capacity_bytes() -> int:
    try:
        return int(pltpu.get_tpu_info().vmem_capacity_bytes)
    except Exception:
        return 64 * 1024 * 1024          # conservative (v7x-sized) fallback


_VMEM_CAP = _vmem_capacity_bytes()
# Scoped-VMEM limit handed to Mosaic: <= 50% of physical, capped at 40 MiB so
# v7x (64 MiB physical) keeps headroom while v5e/v6e (128 MiB physical, 16/32
# MiB default scoped limit) get explicit room for multi-MiB tiles.
_VMEM_LIMIT = min(_VMEM_CAP // 2, 40 * 1024 * 1024)
# Target bytes per buffered block: ~2 MiB amortises the ~0.35 us per-grid-step
# overhead to <10% of each tile's HBM time on all generations.
_TILE_BYTES = 2 * 1024 * 1024
# Whole-waveform single-pass LN is used when the raw audio fits this budget.
_FUSED_LN_BYTES = 4 * 1024 * 1024


def _choose_slab_cols(total: int):
    """Largest lane width (multiple of 128, <= 1024) dividing `total`,
    preferring >= 8 dense sublane rows.  None if total is not 128-divisible."""
    fallback = None
    for cols in (1024, 512, 256, 128):
        if total % cols == 0:
            if total // cols >= 8:
                return cols
            if fallback is None:
                fallback = cols
    return fallback


def _row_tile(rows: int, cols: int, dsize: int) -> int:
    """Largest multiple-of-8 divisor of `rows` giving ~_TILE_BYTES tiles."""
    if rows <= 8:
        return rows
    tmax = max(8, _TILE_BYTES // (cols * dsize))
    t = min(rows, tmax)
    t -= t % 8
    while t >= 8:
        if rows % t == 0:
            return t
        t -= 8
    return rows


# ---------------------------------------------------------------------------
# Kernel 1: F.layer_norm(x, x.shape) — normalize over the WHOLE tensor, no affine
# ---------------------------------------------------------------------------

def _ln_fused_kernel(x_ref, o_ref, *, inv_n, eps):
    # Whole waveform resident in VMEM: centered two-pass variance (no
    # E[x^2]-E[x]^2 cancellation) at zero extra HBM cost.
    x = x_ref[...].astype(jnp.float32)
    mean = jnp.sum(x) * inv_n
    xc = x - mean
    var = jnp.sum(xc * xc) * inv_n
    o_ref[...] = (xc * jax.lax.rsqrt(var + eps)).astype(o_ref.dtype)


def _ln_stats_kernel(x_ref, sum_ref, sq_ref, psum_ref, psq_ref):
    @pl.when(pl.program_id(0) == 0)
    def _():
        psum_ref[...] = jnp.zeros_like(psum_ref)
        psq_ref[...] = jnp.zeros_like(psq_ref)

    # Lane-wise partials: each step only folds the sublane axis (plain VPU
    # adds that hide under the tile DMA).  The cross-lane reduce and the
    # narrow (1,1) store happen exactly once, at the last grid step.
    x = x_ref[...].astype(jnp.float32)
    psum_ref[...] += jnp.sum(x, axis=0, keepdims=True)
    psq_ref[...] += jnp.sum(x * x, axis=0, keepdims=True)

    @pl.when(pl.program_id(0) == pl.num_programs(0) - 1)
    def _():
        sum_ref[...] = jnp.sum(psum_ref[...], keepdims=True)
        sq_ref[...] = jnp.sum(psq_ref[...], keepdims=True)


def _ln_apply_kernel(s_ref, sq_ref, x_ref, o_ref, *, inv_n, eps):
    # sum/sumsq live in SMEM; mean/inv are a handful of scalar-unit ops per
    # step, so no tiny XLA glue sits between the two pallas_calls.
    mean = s_ref[0, 0] * inv_n
    var = sq_ref[0, 0] * inv_n - mean * mean
    inv = jax.lax.rsqrt(var + eps)
    o_ref[...] = ((x_ref[...].astype(jnp.float32) - mean) * inv).astype(o_ref.dtype)


def full_tensor_layer_norm(x, eps=1e-5, fused_budget_bytes=_FUSED_LN_BYTES):
    """Pallas equivalent of torch.nn.functional.layer_norm(x, x.shape)."""
    orig_shape = x.shape
    dsize = jnp.dtype(x.dtype).itemsize
    total = int(x.size)
    inv_n = 1.0 / float(total)
    eps = float(eps)

    cols = _choose_slab_cols(total)

    # ---- fused single pass: 1 HBM read + 1 HBM write -----------------------
    if total * dsize <= fused_budget_bytes:
        if cols is not None:
            slab = x.reshape(total // cols, cols)   # free: contiguous reshape
        else:
            slab = x if x.ndim == 2 else x.reshape(1, total)
        out = pl.pallas_call(
            functools.partial(_ln_fused_kernel, inv_n=inv_n, eps=eps),
            out_shape=jax.ShapeDtypeStruct(slab.shape, x.dtype),
            grid_spec=pltpu.PrefetchScalarGridSpec(
                num_scalar_prefetch=0,
                grid=(1,),
                in_specs=[pl.BlockSpec(slab.shape, lambda i: (0, 0))],
                out_specs=pl.BlockSpec(slab.shape, lambda i: (0, 0))),
            compiler_params=pltpu.CompilerParams(
                dimension_semantics=("arbitrary",),
                vmem_limit_bytes=_VMEM_LIMIT),
        )(slab)
        return out.reshape(orig_shape)

    # ---- two-pass tiled path for long waveforms ----------------------------
    pad = 0
    if cols is None:
        # Non-128-divisible length: one-time zero pad so every tile is dense.
        # Zeros add nothing to sum/sumsq and inv_n uses the true count.
        cols = 1024
        rt = 512 if total >= 512 * 1024 else 8
        block = rt * cols
        padded = ((total + block - 1) // block) * block
        pad = padded - total
        flat = jnp.pad(x.reshape(-1), (0, pad))
        rows = padded // cols
    else:
        flat = x.reshape(-1)
        rows = total // cols
        rt = _row_tile(rows, cols, dsize)

    slab = flat.reshape(rows, cols)
    grid = (rows // rt,)

    s, sq = pl.pallas_call(
        _ln_stats_kernel,
        out_shape=(jax.ShapeDtypeStruct((1, 1), jnp.float32),
                   jax.ShapeDtypeStruct((1, 1), jnp.float32)),
        grid_spec=pltpu.PrefetchScalarGridSpec(
            num_scalar_prefetch=0,
            grid=grid,
            in_specs=[pl.BlockSpec((rt, cols), lambda i: (i, 0))],
            out_specs=(pl.BlockSpec((1, 1), lambda i: (0, 0)),
                       pl.BlockSpec((1, 1), lambda i: (0, 0))),
            scratch_shapes=[pltpu.VMEM((1, cols), jnp.float32),
                            pltpu.VMEM((1, cols), jnp.float32)]),
        compiler_params=pltpu.CompilerParams(
            dimension_semantics=("arbitrary",),
            vmem_limit_bytes=_VMEM_LIMIT),
    )(slab)

    out = pl.pallas_call(
        functools.partial(_ln_apply_kernel, inv_n=inv_n, eps=eps),
        out_shape=jax.ShapeDtypeStruct(slab.shape, x.dtype),
        grid_spec=pltpu.PrefetchScalarGridSpec(
            num_scalar_prefetch=0,
            grid=grid,
            in_specs=[pl.BlockSpec(memory_space=pltpu.MemorySpace.SMEM),  # sum
                      pl.BlockSpec(memory_space=pltpu.MemorySpace.SMEM),  # sumsq
                      pl.BlockSpec((rt, cols), lambda i: (i, 0))],
            out_specs=pl.BlockSpec((rt, cols), lambda i: (i, 0))),
        compiler_params=pltpu.CompilerParams(
            dimension_semantics=("parallel",),
            vmem_limit_bytes=_VMEM_LIMIT),
    )(s, sq, slab)

    flat_out = out.reshape(-1)
    if pad:
        flat_out = flat_out[:total]
    return flat_out.reshape(orig_shape)


# ---------------------------------------------------------------------------
# Kernel 2: softmax-weighted sum over layer representations + permute(0, 2, 1)
# ---------------------------------------------------------------------------

def _wsum_kernel(w_ref, x_ref, o_ref, acc_ref, *, t_chunk):
    l = pl.program_id(3)

    @pl.when(l == 0)
    def _():
        acc_ref[...] = jnp.zeros_like(acc_ref)

    # (tt, dt) layer tile scaled by its scalar softmax weight read from SMEM.
    acc_ref[...] += x_ref[...].astype(jnp.float32) * w_ref[l]

    @pl.when(l == pl.num_programs(3) - 1)
    def _():
        # Fused permute(0, 2, 1): transpose the accumulator in VMEM and store
        # it (B, D, T)-major.  Done in 128-lane slabs so each XLU transpose /
        # store chunk is small and hides under the next tile's input DMA.
        tt = acc_ref.shape[0]
        if t_chunk is not None and t_chunk < tt:
            for j in range(tt // t_chunk):
                lo = j * t_chunk
                o_ref[:, lo:lo + t_chunk] = jnp.swapaxes(
                    acc_ref[lo:lo + t_chunk, :], 0, 1).astype(o_ref.dtype)
        else:
            o_ref[...] = jnp.swapaxes(acc_ref[...], 0, 1).astype(o_ref.dtype)


def _choose_time_tile(T, D, dsize):
    """Largest multiple-of-128 divisor of T whose (tt, D) tile is ~_TILE_BYTES.
    Falls back to full T when T is not 128-aligned (full-dim blocks are always
    legal; only then is the writeback tail masked)."""
    if T % 128 != 0:
        return T
    tmax = max(128, (_TILE_BYTES // (D * dsize)) // 128 * 128)
    t = min(T, tmax)
    t -= t % 128
    while t >= 128:
        if T % t == 0:
            return t
        t -= 128
    return T


def wavlm_weighted_sum(layer_reps, weights):
    """layer_reps: (L, B, T, D); weights: (L,).  Returns (B, D, T) =
    permute(sum_l softmax(weights)[l] * layer_reps[l], (0, 2, 1))."""
    L, B, T, D = layer_reps.shape
    assert weights.shape == (L,)
    dsize = jnp.dtype(layer_reps.dtype).itemsize

    # softmax of the tiny (L,) layer weights stays in the wrapper.
    w_norm = jax.nn.softmax(weights.astype(jnp.float32))          # (L,) -> SMEM

    dt = D                               # full-D tiles: contiguous per-layer DMA
    tt = _choose_time_tile(T, D, dsize)

    # v7x has 2 TensorCores: guarantee >= 2 blocks on the 'parallel' axes so a
    # core never idles (no effect on 1-TC v5e/v6e, just a smaller tile).
    if B * (T // tt) * (D // dt) < 2:
        if tt % 256 == 0:
            tt //= 2
        elif dt % 256 == 0:
            dt //= 2

    t_chunk = 128 if (tt % 128 == 0 and tt > 128) else None
    grid = (B, T // tt, D // dt, L)      # layer axis last = reduction axis

    return pl.pallas_call(
        functools.partial(_wsum_kernel, t_chunk=t_chunk),
        out_shape=jax.ShapeDtypeStruct((B, D, T), layer_reps.dtype),
        grid_spec=pltpu.PrefetchScalarGridSpec(
            num_scalar_prefetch=0,
            grid=grid,
            in_specs=[
                pl.BlockSpec(memory_space=pltpu.MemorySpace.SMEM),   # w_norm
                pl.BlockSpec((None, None, tt, dt),
                             lambda b, t, d, l: (l, b, t, d)),
            ],
            out_specs=pl.BlockSpec((None, dt, tt),
                                   lambda b, t, d, l: (b, d, t)),
            scratch_shapes=[pltpu.VMEM((tt, dt), jnp.float32)]),
        compiler_params=pltpu.CompilerParams(
            dimension_semantics=("parallel", "parallel", "parallel",
                                 "arbitrary"),
            vmem_limit_bytes=_VMEM_LIMIT),
    )(w_norm, layer_reps)


def wavlm_ptm_forward(x_wave, layer_reps, weights, normalize=True):
    """WavLMPtm.forward with the frozen WavLM backbone stubbed out.

    x_wave: (B, S) raw waveform; layer_reps: (L, B, T, D) per-layer hidden
    states (already (B, T, D) per layer, i.e. after transpose(0, 1));
    weights: (L,) learnable layer weights.  Returns (B, D, T)."""
    if normalize:
        x_wave = full_tensor_layer_norm(x_wave)
    # TODO(synk): WavLM backbone (conv feature extractor + transformer encoder
    # stack loaded from WavLM-Large.pt) is not translated; `layer_reps` stands
    # in for the per-layer outputs it would produce from `x_wave`.
    del x_wave
    return wavlm_weighted_sum(layer_reps, weights)


# ---------------------------------------------------------------------------
# Pure-JAX references
# ---------------------------------------------------------------------------

def _layer_norm_ref(x, eps=1e-5):
    mu = jnp.mean(x)
    var = jnp.mean((x - mu) ** 2)
    return (x - mu) * jax.lax.rsqrt(var + eps)


def _weighted_sum_ref(layer_reps, weights):
    w = jax.nn.softmax(weights)
    out = jnp.einsum('l,lbtd->btd', w, layer_reps)
    return jnp.transpose(out, (0, 2, 1))


if __name__ == "__main__":
    key = jax.random.PRNGKey(0)
    k1, k2, k3, k4, k5 = jax.random.split(key, 5)

    # ---- Kernel 1: full-tensor layer norm ----------------------------------
    # (a) small waveform -> fused single-pass path
    B, S = 2, 1024
    x_wave = jax.random.normal(k1, (B, S), dtype=jnp.float32)
    x_norm = full_tensor_layer_norm(x_wave)
    jax.block_until_ready(x_norm)
    assert x_norm.shape == (B, S)
    assert jnp.allclose(x_norm, _layer_norm_ref(x_wave), atol=1e-4, rtol=1e-4), \
        "fused layer-norm mismatch vs reference"

    # (b) long waveform -> two-pass tiled path over a dense (rows, 1024) slab
    x_long = jax.random.normal(k2, (2, 1 << 20), dtype=jnp.float32) * 0.5 + 0.25
    y_long = full_tensor_layer_norm(x_long)
    jax.block_until_ready(y_long)
    assert jnp.allclose(y_long, _layer_norm_ref(x_long), atol=1e-3, rtol=1e-3), \
        "two-pass layer-norm mismatch vs reference"

    # (c) odd (non-128-divisible) long waveform -> zero-pad fallback
    x_odd = jax.random.normal(k3, (1, 1_200_001), dtype=jnp.float32)
    y_odd = full_tensor_layer_norm(x_odd)
    jax.block_until_ready(y_odd)
    assert y_odd.shape == x_odd.shape
    assert jnp.allclose(y_odd, _layer_norm_ref(x_odd), atol=1e-3, rtol=1e-3), \
        "padded layer-norm mismatch vs reference"

    # ---- Kernels 1+2: full WavLMPtm forward (backbone stubbed) -------------
    NUM_LAYERS = 5
    L, T, D = NUM_LAYERS + 1, 16, 32
    layer_reps = jax.random.normal(k4, (L, B, T, D), dtype=jnp.float32)
    # self.weights = softmax(linspace(1.0, 0.1, L)) as in WavLMPtm.__init__;
    # forward() softmaxes that parameter once more (matched here).
    weights = jax.nn.softmax(jnp.linspace(1.0, 0.1, L).astype(jnp.float32))

    out = wavlm_ptm_forward(x_wave, layer_reps, weights, normalize=True)
    jax.block_until_ready(out)
    assert out.shape == (B, D, T)
    assert jnp.allclose(out, _weighted_sum_ref(layer_reps, weights),
                        atol=1e-5, rtol=1e-5), "weighted-sum mismatch vs reference"

    # ---- Kernel 2 at a 128-aligned shape (exercises full-D tiling and the
    # chunked in-VMEM transpose of the fused permute) -------------------------
    L2, B2, T2, D2 = 4, 2, 256, 128
    reps2 = jax.random.normal(k5, (L2, B2, T2, D2), dtype=jnp.float32)
    w2 = jnp.linspace(1.0, 0.1, L2).astype(jnp.float32)
    out2 = wavlm_weighted_sum(reps2, w2)
    jax.block_until_ready(out2)
    assert out2.shape == (B2, D2, T2)
    assert jnp.allclose(out2, _weighted_sum_ref(reps2, w2),
                        atol=1e-5, rtol=1e-5), "tiled weighted-sum mismatch"

    print("KERNEL_OK")
</pallas_src>

<mosaic_0001>
module attributes {stable_mosaic.version = 11 : i64} {
  func.func @_ln_fused_kernel(%arg0: i32, %arg1: memref<8x256xf32, #tpu.memory_space<vmem>>, %arg2: memref<8x256xf32, #tpu.memory_space<vmem>>) attributes {dimension_semantics = [#tpu.dimension_semantics<arbitrary>], iteration_bounds = array<i64: 1>, scalar_prefetch = 0 : i64, scratch_operands = 0 : i64, tpu.core_type = #tpu.core_type<tc>, window_params = [{pipeline_mode = #tpu.pipeline_mode<synchronous>, transform_indices = @transform_0, window_bounds = array<i64: 8, 256>}, {pipeline_mode = #tpu.pipeline_mode<synchronous>, transform_indices = @transform_1, window_bounds = array<i64: 8, 256>}]} {
    %c0 = arith.constant 0 : index
    %c0_0 = arith.constant 0 : index
    %0 = vector.load %arg1[%c0, %c0_0] : memref<8x256xf32, #tpu.memory_space<vmem>>, vector<8x256xf32>
    %1 = vector.shape_cast %0 : vector<8x256xf32> to vector<1x8x256xf32>
    %cst = arith.constant dense<0.000000e+00> : vector<1xf32>
    %2 = vector.multi_reduction <add>, %1, %cst [1, 2] : vector<1x8x256xf32> to vector<1xf32>
    %3 = vector.shape_cast %2 : vector<1xf32> to vector<1x1x1xf32>
    %4 = vector.extract %3[0, 0, 0] : f32 from vector<1x1x1xf32>
    %cst_1 = arith.constant 4.8828125E-4 : f32
    %5 = arith.mulf %4, %cst_1 : f32
    %6 = vector.broadcast %5 : f32 to vector<8x256xf32>
    %7 = arith.subf %0, %6 : vector<8x256xf32>
    %8 = arith.mulf %7, %7 : vector<8x256xf32>
    %9 = vector.shape_cast %8 : vector<8x256xf32> to vector<1x8x256xf32>
    %cst_2 = arith.constant dense<0.000000e+00> : vector<1xf32>
    %10 = vector.multi_reduction <add>, %9, %cst_2 [1, 2] : vector<1x8x256xf32> to vector<1xf32>
    %11 = vector.shape_cast %10 : vector<1xf32> to vector<1x1x1xf32>
    %12 = vector.extract %11[0, 0, 0] : f32 from vector<1x1x1xf32>
    %cst_3 = arith.constant 4.8828125E-4 : f32
    %13 = arith.mulf %12, %cst_3 : f32
    %cst_4 = arith.constant 9.99999974E-6 : f32
    %14 = arith.addf %13, %cst_4 : f32
    %15 = math.rsqrt %14 : f32
    %16 = vector.broadcast %15 : f32 to vector<8x256xf32>
    %17 = arith.mulf %7, %16 : vector<8x256xf32>
    %c0_5 = arith.constant 0 : index
    %c0_6 = arith.constant 0 : index
    %18 = vector.load %arg2[%c0_5, %c0_6] : memref<8x256xf32, #tpu.memory_space<vmem>>, vector<8x256xf32>
    tpu.vector_store %arg2[%c0_5, %c0_6], %17 {strides = array<i32>} : memref<8x256xf32, #tpu.memory_space<vmem>>, vector<8x256xf32>,
    return
  }
  func.func @transform_0(%arg0: i32) -> (i32, i32) {
    %c0_i32 = arith.constant 0 : i32
    %c0_i32_0 = arith.constant 0 : i32
    %c0_i32_1 = arith.constant 0 : i32
    return %c0_i32, %c0_i32_0 : i32, i32
  }
  func.func @transform_1(%arg0: i32) -> (i32, i32) {
    %c0_i32 = arith.constant 0 : i32
    %c0_i32_0 = arith.constant 0 : i32
    %c0_i32_1 = arith.constant 0 : i32
    return %c0_i32, %c0_i32_0 : i32, i32
  }
}

</mosaic_0001>

<llo_original>
// kernel: tpu_custom_call.1
$region0: #{tpu_custom_call.1}
  #allocation0 [shape = 'u32[]', space=smem, size = 0x4, offset = 0x4, fixed_abs, tag = 'smem constant byte address 0x4 - core index']
  #allocation1 [shape = 'u32[144,128]{1,0:T(1,128)}', space=vmem, size = 0x12000, scoped, tag = 'internal scratch']
  %s0 = inlined_call_operand.hbm [shape: f32[8,256], index: 0, kind: input, shape index: {}]
  %s1 = inlined_call_operand.hbm [shape: f32[8,256], index: 1, kind: output, shape index: {}]
  %s2 = sld [smem:[#allocation0]]
  $region18: #{tpu_custom_call.1} parent=0
    _
  %s4 = ssub.s32 1, %s2
  %s5 = scalar_select 0, %s4, %s2
  $region1: #{tpu_custom_call.1} parent=0
    #allocation2 [shape = 'u8[8192]{0}', space=vmem, size = 0x2000, scoped, tag = 'input window, operand 0, single buffered']
    #allocation3 [shape = 's32[1]{0}', space=sflag, size = 0x4, scoped, tag = 'scoped memory for tpu_custom_call.1']
    #allocation4 [shape = 's32[1]{0}', space=sflag, size = 0x4, scoped, tag = 'scoped memory for tpu_custom_call.1']
    #allocation5 [shape = 'u8[8192]{0}', space=vmem, size = 0x2000, scoped, tag = 'output window, operand 0, single buffered']
    %6 = vsyncpa [#allocation3], 0
    %7 = vsyncpa [#allocation4], 0
    // Predicated region
    $region2: #{tpu_custom_call.1} parent=1 // pred_check
      _
    $region3: #{tpu_custom_call.1} parent=1 // pred_check_branch
      %9 = sbr.rel (0) target = $region5
    $region4: #{tpu_custom_call.1} parent=1 // pred_region
      %s11 = ssub.s32 256, 256
      %12 = vsyncadd [#allocation3], %s11
      %s14 = sshll.u32 [#allocation2], 4
      %s15 = int_to_ptr.vmem [resolvable:$true] %s14
      %17 = dma.hbm_to_vmem [thread:$0]  %s0, 256, %s15, [#allocation3]
    $region5: #{tpu_custom_call.1} parent=1 // pred_fallthru
      _
    // Predicated region
    $region6: #{tpu_custom_call.1} parent=1 // pred_check
      _
    $region7: #{tpu_custom_call.1} parent=1 // pred_check_branch
      %19 = sbr.rel (0) target = $region9
    $region8: #{tpu_custom_call.1} parent=1 // pred_region
      %20 = dma.done [#allocation3], 256
    $region9: #{tpu_custom_call.1} parent=1 // pred_fallthru
      _
    %v21 = vld [vmem:[#allocation2] sm:$0xff]
    %v22 = vld [vmem:[#allocation2 + $0x8] sm:$0xff]
    %v23 = vadd.f32 %v21, %v22
    %24 = vadd.xlane.f32.xlu0 %v23
    %v25 = vpop.xlane.xlu0 %24
    %v26 = vrot.slane %v25, 4
    %v27 = vadd.f32 %v25, %v26
    %v28 = vrot.slane %v27, 2
    %v29 = vadd.f32 %v27, %v28
    %v30 = vrot.slane %v29, 1
    %v31 = vadd.f32 %v29, %v30
    %s32 = vtos %v31
    %s33 = smul.f32 %s32, 0.00048828125
    %v34 = vstv %s33
    %v35 = vsub.f32 %v21, %v34
    %v36 = vsub.f32 %v22, %v34
    %v37 = vmul.f32 %v35, %v35
    %v38 = vmul.f32 %v36, %v36
    %v39 = vadd.f32 %v37, %v38
    %40 = vadd.xlane.f32.xlu0 %v39
    %v41 = vpop.xlane.xlu0 %40
    %v42 = vrot.slane %v41, 4
    %v43 = vadd.f32 %v41, %v42
    %v44 = vrot.slane %v43, 2
    %v45 = vadd.f32 %v43, %v44
    %v46 = vrot.slane %v45, 1
    %v47 = vadd.f32 %v45, %v46
    %s48 = vtos %v47
    %s49 = smul.f32 %s48, 0.00048828125
    %s50 = sadd.f32 %s49, 1e-05
    %v51 = vstv %s50
    %v52 = vrsqrt.pop %v51
    %s53 = vtos %v52
    %v54 = vstv %s53
    %v55 = vmul.f32 %v35, %v54
    %v56 = vmul.f32 %v36, %v54
    %57 = vst [vmem:[#allocation5] sm:$0xff] %v55
    %58 = vst [vmem:[#allocation5 + $0x8] sm:$0xff] %v56
    // Predicated region
    $region10: #{tpu_custom_call.1} parent=1 // pred_check
      _
    $region11: #{tpu_custom_call.1} parent=1 // pred_check_branch
      %60 = sbr.rel (0) target = $region13
    $region12: #{tpu_custom_call.1} parent=1 // pred_region
      %s62 = ssub.s32 256, 256
      %63 = vsyncadd [#allocation4], %s62
      %s65 = sshll.u32 [#allocation5], 4
      %s66 = int_to_ptr.vmem [resolvable:$true] %s65
      %68 = dma.vmem_to_hbm [thread:$0]  %s66, 256, %s1, [#allocation4]
    $region13: #{tpu_custom_call.1} parent=1 // pred_fallthru
      _
    // Predicated region
    $region14: #{tpu_custom_call.1} parent=1 // pred_check
      _
    $region15: #{tpu_custom_call.1} parent=1 // pred_check_branch
      %70 = sbr.rel (0) target = $region17
    $region16: #{tpu_custom_call.1} parent=1 // pred_region
      %71 = dma.done [#allocation4], 256
    $region17: #{tpu_custom_call.1} parent=1 // pred_fallthru
      _
    %72 = vsyncpa [#allocation3], 1
    %73 = vsyncpa [#allocation4], 1

</llo_original>
